<compile_context>
chip_gen: v7x
topology: tpu7x:2x2x1
jax: 0.10.0
libtpu: 0.0.40
codegen_flags: <defaults>
</compile_context>

<pallas_src>
import functools
import math

import jax
import jax.numpy as jnp
from jax.experimental import pallas as pl
from jax.experimental.pallas import tpu as pltpu


# ----------------------------- helpers -----------------------------

def _round_up(x, m):
    return ((x + m - 1) // m) * m


def _vmem_capacity_bytes():
    """Physical VMEM per TensorCore (128 MiB on v5e/v6e, 64 MiB on v7x)."""
    try:
        return int(pltpu.get_tpu_info().vmem_capacity_bytes)
    except Exception:
        return 64 * 2**20  # conservative fallback (v7x per-core budget)


def _vmem_limit_bytes(footprint_bytes, vmem_cap):
    """Scoped-VMEM limit for one pallas_call: footprint + compiler headroom,
    clamped below physical capacity."""
    return int(min(0.9 * vmem_cap, footprint_bytes + 16 * 2**20))


def _pick_tile(dim, cap=512):
    """Largest multiple-of-128 divisor of `dim` (itself a multiple of 128), <= cap.
    Big tiles fill the 256-wide MXUs on v6e/v7x and keep stores lane-dense."""
    best = 128
    t = 256
    while t <= min(dim, cap):
        if dim % t == 0:
            best = t
        t += 128
    return best


def _fused_batch_tiling(batch):
    """(padded_batch, batch_tile) for the fused path. Splits into >=2 programs when
    batch >= 32 so both TensorCores on v7x get work along the 'parallel' axis."""
    bp8 = _round_up(batch, 8)
    if bp8 < 32:
        return bp8, bp8
    if bp8 <= 256:
        tm = _round_up((bp8 + 1) // 2, 8)
        return 2 * tm, tm
    tm = 128
    return _round_up(batch, tm), tm


def _tiled_batch_tiling(batch):
    """(padded_batch, batch_tile) for the per-layer tiled path. Grows tm toward 512
    (mem-bound kernels reach ~85% of HBM roofline at 512-tiles vs ~29% at 128)."""
    bp8 = _round_up(batch, 8)
    for t in (512, 256, 128):
        if bp8 >= t:
            return _round_up(batch, t), t
    return bp8, bp8


# ----------------------- fused whole-MLP kernel -----------------------

def _fused_mlp_kernel(x_ref, *args, num_layers, compute_dtype):
    # args = [w0, b0, w1, b1, ..., out_ref]; weights/biases are full VMEM-resident.
    o_ref = args[-1]
    wb = args[:-1]
    h = x_ref[...]                                      # (tm, K0) compute_dtype
    for l in range(num_layers):
        w = wb[2 * l][...]                              # (K_l, N_l) compute_dtype
        b = wb[2 * l + 1][...]                          # (1,  N_l) f32
        acc = jnp.dot(h, w, preferred_element_type=jnp.float32)   # MXU, f32 acc
        a = jnp.maximum(acc + b, 0.0)                   # bias + ReLU in f32 (VPU)
        # Keep inter-layer activations in compute dtype (halves live footprint);
        # the final layer stays f32 for the f32 output store.
        h = a if l == num_layers - 1 else a.astype(compute_dtype)
    o_ref[...] = h.astype(o_ref.dtype)


def _fused_mlp(x_pad, weights, biases, tm, compute_dtype, vmem_cap):
    bp, kp = x_pad.shape
    n_last = weights[-1].shape[1]
    grid = (bp // tm,)
    c_item = jnp.dtype(compute_dtype).itemsize

    in_specs = [pl.BlockSpec((tm, kp), lambda i: (i, 0))]
    operands = [x_pad]
    # Weights / biases: whole-array VMEM residency -> single copy, no double buffer.
    resident = pl.BlockSpec(memory_space=pltpu.MemorySpace.VMEM)
    w_bytes = 0
    max_n = kp
    for w, b in zip(weights, biases):
        in_specs.append(resident)
        in_specs.append(resident)
        operands.extend([w, b])
        w_bytes += w.size * c_item + b.size * 4
        max_n = max(max_n, w.shape[1])

    footprint = (w_bytes                               # resident weights + biases (1x)
                 + 2 * tm * kp * c_item                # double-buffered x tile
                 + 2 * tm * n_last * 4                 # double-buffered f32 out tile
                 + 2 * tm * max_n * (4 + c_item))      # live activation headroom

    kernel = functools.partial(
        _fused_mlp_kernel, num_layers=len(weights), compute_dtype=compute_dtype)

    return pl.pallas_call(
        kernel,
        out_shape=jax.ShapeDtypeStruct((bp, n_last), jnp.float32),
        grid=grid,
        in_specs=in_specs,
        out_specs=pl.BlockSpec((tm, n_last), lambda i: (i, 0)),
        compiler_params=pltpu.CompilerParams(
            dimension_semantics=("parallel",),
            vmem_limit_bytes=_vmem_limit_bytes(footprint, vmem_cap)),
    )(*operands)


# ----------------- per-layer M/N/K-tiled Linear+ReLU -----------------

def _linear_relu_out_acc_kernel(x_ref, w_ref, b_ref, o_ref):
    """f32 output (final layer): accumulate directly into the resident output block."""
    k = pl.program_id(2)

    @pl.when(k == 0)
    def _():
        o_ref[...] = jnp.zeros_like(o_ref)

    o_ref[...] += jnp.dot(x_ref[...], w_ref[...],
                          preferred_element_type=jnp.float32)

    @pl.when(k == pl.num_programs(2) - 1)
    def _():
        o_ref[...] = jnp.maximum(o_ref[...] + b_ref[...], 0.0)


def _linear_relu_scratch_kernel(x_ref, w_ref, b_ref, o_ref, acc_ref):
    """bf16 (intermediate-layer) output: f32 VMEM accumulator, cast on the last k."""
    k = pl.program_id(2)

    @pl.when(k == 0)
    def _():
        acc_ref[...] = jnp.zeros_like(acc_ref)

    acc_ref[...] += jnp.dot(x_ref[...], w_ref[...],
                            preferred_element_type=jnp.float32)

    @pl.when(k == pl.num_programs(2) - 1)
    def _():
        o_ref[...] = jnp.maximum(acc_ref[...] + b_ref[...], 0.0).astype(o_ref.dtype)


def _linear_relu_tiled(x_pad, w, b, tm, out_dtype, vmem_cap):
    m, k = x_pad.shape
    kw, n = w.shape
    assert k == kw
    tk = _pick_tile(k)
    tn = _pick_tile(n)
    grid = (m // tm, n // tn, k // tk)

    out_dtype = jnp.dtype(out_dtype)
    use_scratch = out_dtype != jnp.dtype(jnp.float32)

    footprint = (2 * tm * tk * x_pad.dtype.itemsize     # x tile, double-buffered
                 + 2 * tk * tn * w.dtype.itemsize        # weight tile, double-buffered
                 + 2 * 8 * tn * 4                        # bias tile (padded sublanes)
                 + 2 * tm * tn * out_dtype.itemsize      # out tile, double-buffered
                 + (tm * tn * 4 if use_scratch else 0))  # f32 accumulator

    kernel = _linear_relu_scratch_kernel if use_scratch else _linear_relu_out_acc_kernel
    scratch = [pltpu.VMEM((tm, tn), jnp.float32)] if use_scratch else []

    # TODO(synk): optionally sweep pipeline_mode=pl.Buffered(3) on the weight spec for
    # layers whose K loop is short and the weight DMA is exposed.
    return pl.pallas_call(
        kernel,
        out_shape=jax.ShapeDtypeStruct((m, n), out_dtype),
        grid=grid,
        in_specs=[
            pl.BlockSpec((tm, tk), lambda i, j, kk: (i, kk)),
            pl.BlockSpec((tk, tn), lambda i, j, kk: (kk, j)),
            pl.BlockSpec((1, tn), lambda i, j, kk: (0, j)),
        ],
        out_specs=pl.BlockSpec((tm, tn), lambda i, j, kk: (i, j)),
        scratch_shapes=scratch,
        compiler_params=pltpu.CompilerParams(
            dimension_semantics=("parallel", "parallel", "arbitrary"),
            vmem_limit_bytes=_vmem_limit_bytes(footprint, vmem_cap)),
    )(x_pad, w, b)


# -------------------------- parameters --------------------------

def init_regular_nn_params(key, input_size, layer_sizes, dtype=jnp.float32):
    """PyTorch nn.Linear-style params: weight (out, in), bias (out,)."""
    params = []
    in_dim = input_size
    for out_dim in layer_sizes:
        key, kw, kb = jax.random.split(key, 3)
        bound = 1.0 / math.sqrt(in_dim)
        w = jax.random.uniform(kw, (out_dim, in_dim), dtype, -bound, bound)
        b = jax.random.uniform(kb, (out_dim,), dtype, -bound, bound)
        params.append((w, b))
        in_dim = out_dim
    return params


def prepare_params(params, input_size, compute_dtype=jnp.bfloat16):
    """One-time prep (outside the hot path): transpose to (in, out), zero-pad both
    dims to multiples of 128, cast weights to the MXU compute dtype.
    Biases stay f32, shape (1, N_pad). compute_dtype=jnp.float32 is the
    bit-accuracy escape hatch."""
    weights, biases = [], []
    in_dim = input_size
    for w, b in params:
        out_dim, kin = w.shape
        assert kin == in_dim
        kp = _round_up(in_dim, 128)
        np_ = _round_up(out_dim, 128)
        w_t = jnp.zeros((kp, np_), jnp.float32).at[:in_dim, :out_dim].set(w.T)
        b_p = jnp.zeros((1, np_), jnp.float32).at[0, :out_dim].set(b)
        weights.append(w_t.astype(compute_dtype))
        biases.append(b_p)
        in_dim = out_dim
    return weights, biases


# ---------------------------- forward ----------------------------

def make_regular_nn_forward(input_size, layer_sizes, compute_dtype=jnp.bfloat16,
                            fuse=None):
    """Jitted forward(x, weights, biases) matching RegularNN.forward
    (x = relu(linear(x)) for every layer). fuse=None -> auto (generation-aware
    VMEM budget); True / False force the fused / per-layer tiled path."""
    layer_sizes = tuple(int(s) for s in layer_sizes)
    compute_dtype = jnp.dtype(compute_dtype)
    c_item = compute_dtype.itemsize
    kp0 = _round_up(input_size, 128)
    padded = [kp0] + [_round_up(n, 128) for n in layer_sizes]
    vmem_cap = _vmem_capacity_bytes()

    # Full fused-path VMEM footprint at the largest fused batch tile (tm <= 128).
    tm_bound = 128
    fused_footprint = (
        sum(padded[i] * padded[i + 1] for i in range(len(layer_sizes))) * c_item
        + sum(padded[1:]) * 4
        + 2 * tm_bound * padded[0] * c_item
        + 2 * tm_bound * padded[-1] * 4
        + 2 * tm_bound * max(padded) * (4 + c_item))
    if fuse is None:
        use_fused = fused_footprint <= 0.6 * vmem_cap
    else:
        use_fused = bool(fuse)

    def forward(x, weights, biases):
        b, k = x.shape
        assert k == input_size
        bp, tm = (_fused_batch_tiling(b) if use_fused else _tiled_batch_tiling(b))
        # Pad + cast to the compute dtype in one wrapper op; skip the copy entirely
        # when the shapes are already aligned.
        if bp == b and kp0 == k:
            x_pad = x if x.dtype == compute_dtype else x.astype(compute_dtype)
        else:
            x_pad = (jnp.zeros((bp, kp0), compute_dtype)
                     .at[:b, :k].set(x.astype(compute_dtype)))
        if use_fused:
            out = _fused_mlp(x_pad, weights, biases, tm, compute_dtype, vmem_cap)
        else:
            h = x_pad
            last = len(weights) - 1
            for l, (w, bia) in enumerate(zip(weights, biases)):
                # Intermediate activations round-trip HBM in the compute dtype
                # (halves activation traffic); only the final layer stays f32.
                out_dtype = jnp.float32 if l == last else compute_dtype
                h = _linear_relu_tiled(h, w, bia, tm, out_dtype, vmem_cap)
            out = h
        return out[:b, :layer_sizes[-1]]

    return jax.jit(forward)


# ------------------------------ main ------------------------------

if __name__ == "__main__":
    key = jax.random.PRNGKey(0)
    key, kx, kp = jax.random.split(key, 3)

    # --- Test 1: small RegularNN, fused whole-MLP path, bf16 MXU compute ---
    batch, input_size = 8, 32
    layer_sizes = [64, 32, 16]

    x = jax.random.normal(kx, (batch, input_size), jnp.float32)
    params = init_regular_nn_params(kp, input_size, layer_sizes)

    # Pure-JAX f32 reference (ReLU after every Linear, PyTorch convention).
    ref = x
    for w, b in params:
        ref = jnp.maximum(ref @ w.T + b, 0.0)

    weights, biases = prepare_params(params, input_size, compute_dtype=jnp.bfloat16)
    fwd = make_regular_nn_forward(input_size, layer_sizes, compute_dtype=jnp.bfloat16)
    out = fwd(x, weights, biases)
    jax.block_until_ready(out)
    assert out.shape == (batch, layer_sizes[-1])
    assert jnp.allclose(out, ref, atol=3e-2, rtol=3e-2), \
        float(jnp.max(jnp.abs(out - ref)))

    # --- Test 2: f32 escape hatch (documented bit-accuracy mode), fused path ---
    # Typically ~1e-6 off the reference; the tolerance is kept loose because the
    # MXU's default f32 matmul precision policy may use reduced-precision passes.
    w32, b32 = prepare_params(params, input_size, compute_dtype=jnp.float32)
    fwd32 = make_regular_nn_forward(input_size, layer_sizes, compute_dtype=jnp.float32)
    out32 = fwd32(x, w32, b32)
    jax.block_until_ready(out32)
    assert jnp.allclose(out32, ref, atol=3e-2, rtol=3e-2), \
        float(jnp.max(jnp.abs(out32 - ref)))

    # --- Test 3: per-layer M/N/K-tiled fallback (bf16 intermediates, f32 final) ---
    key, kx2, kp2 = jax.random.split(key, 3)
    batch2, in2, sizes2 = 256, 256, [384, 256]
    x2 = jax.random.normal(kx2, (batch2, in2), jnp.float32)
    params2 = init_regular_nn_params(kp2, in2, sizes2)
    ref2 = x2
    for w, b in params2:
        ref2 = jnp.maximum(ref2 @ w.T + b, 0.0)

    w2, b2 = prepare_params(params2, in2, compute_dtype=jnp.bfloat16)
    fwd2 = make_regular_nn_forward(in2, sizes2, compute_dtype=jnp.bfloat16, fuse=False)
    out2 = fwd2(x2, w2, b2)
    jax.block_until_ready(out2)
    assert out2.shape == (batch2, sizes2[-1])
    assert jnp.allclose(out2, ref2, atol=3e-2, rtol=3e-2), \
        float(jnp.max(jnp.abs(out2 - ref2)))

    print("KERNEL_OK")
</pallas_src>

<mosaic_0001>
module attributes {stable_mosaic.version = 11 : i64} {
  func.func @_fused_mlp_kernel(%arg0: i32, %arg1: memref<8x128xbf16, #tpu.memory_space<vmem>>, %arg2: memref<128x128xbf16, #tpu.memory_space<vmem>>, %arg3: memref<1x128xf32, #tpu.memory_space<vmem>>, %arg4: memref<128x128xbf16, #tpu.memory_space<vmem>>, %arg5: memref<1x128xf32, #tpu.memory_space<vmem>>, %arg6: memref<128x128xbf16, #tpu.memory_space<vmem>>, %arg7: memref<1x128xf32, #tpu.memory_space<vmem>>, %arg8: memref<8x128xf32, #tpu.memory_space<vmem>>) attributes {dimension_semantics = [#tpu.dimension_semantics<parallel>], iteration_bounds = array<i64: 1>, scalar_prefetch = 0 : i64, scratch_operands = 0 : i64, tpu.core_type = #tpu.core_type<tc>, window_params = [{transform_indices = @transform_0, window_bounds = array<i64: 8, 128>}, {pipeline_mode = #tpu.pipeline_mode<synchronous>, transform_indices = @transform_1, window_bounds = array<i64: 128, 128>}, {pipeline_mode = #tpu.pipeline_mode<synchronous>, transform_indices = @transform_2, window_bounds = array<i64: 1, 128>}, {pipeline_mode = #tpu.pipeline_mode<synchronous>, transform_indices = @transform_3, window_bounds = array<i64: 128, 128>}, {pipeline_mode = #tpu.pipeline_mode<synchronous>, transform_indices = @transform_4, window_bounds = array<i64: 1, 128>}, {pipeline_mode = #tpu.pipeline_mode<synchronous>, transform_indices = @transform_5, window_bounds = array<i64: 128, 128>}, {pipeline_mode = #tpu.pipeline_mode<synchronous>, transform_indices = @transform_6, window_bounds = array<i64: 1, 128>}, {transform_indices = @transform_7, window_bounds = array<i64: 8, 128>}]} {
    %c0 = arith.constant 0 : index
    %c0_0 = arith.constant 0 : index
    %0 = vector.load %arg1[%c0, %c0_0] : memref<8x128xbf16, #tpu.memory_space<vmem>>, vector<8x128xbf16>
    %c0_1 = arith.constant 0 : index
    %c0_2 = arith.constant 0 : index
    %1 = vector.load %arg2[%c0_1, %c0_2] : memref<128x128xbf16, #tpu.memory_space<vmem>>, vector<128x128xbf16>
    %c0_3 = arith.constant 0 : index
    %c0_4 = arith.constant 0 : index
    %2 = vector.load %arg3[%c0_3, %c0_4] : memref<1x128xf32, #tpu.memory_space<vmem>>, vector<1x128xf32>
    %cst = arith.constant dense<0.000000e+00> : vector<8x128xf32>
    %3 = tpu.matmul %0, %1, %cst {dimension_numbers = #tpu.dot_dimension_numbers<[1], [0], [0], [1], [0, 0, 1, 1], [], []>} : vector<8x128xbf16>, vector<128x128xbf16>, vector<8x128xf32> -> vector<8x128xf32>
    %4 = vector.broadcast %2 : vector<1x128xf32> to vector<8x128xf32>
    %5 = arith.addf %3, %4 : vector<8x128xf32>
    %cst_5 = arith.constant 0.000000e+00 : f32
    %6 = vector.broadcast %cst_5 : f32 to vector<8x128xf32>
    %7 = arith.maximumf %5, %6 : vector<8x128xf32>
    %8 = arith.truncf %7 : vector<8x128xf32> to vector<8x128xbf16>
    %c0_6 = arith.constant 0 : index
    %c0_7 = arith.constant 0 : index
    %9 = vector.load %arg4[%c0_6, %c0_7] : memref<128x128xbf16, #tpu.memory_space<vmem>>, vector<128x128xbf16>
    %c0_8 = arith.constant 0 : index
    %c0_9 = arith.constant 0 : index
    %10 = vector.load %arg5[%c0_8, %c0_9] : memref<1x128xf32, #tpu.memory_space<vmem>>, vector<1x128xf32>
    %cst_10 = arith.constant dense<0.000000e+00> : vector<8x128xf32>
    %11 = tpu.matmul %8, %9, %cst_10 {dimension_numbers = #tpu.dot_dimension_numbers<[1], [0], [0], [1], [0, 0, 1, 1], [], []>} : vector<8x128xbf16>, vector<128x128xbf16>, vector<8x128xf32> -> vector<8x128xf32>
    %12 = vector.broadcast %10 : vector<1x128xf32> to vector<8x128xf32>
    %13 = arith.addf %11, %12 : vector<8x128xf32>
    %cst_11 = arith.constant 0.000000e+00 : f32
    %14 = vector.broadcast %cst_11 : f32 to vector<8x128xf32>
    %15 = arith.maximumf %13, %14 : vector<8x128xf32>
    %16 = arith.truncf %15 : vector<8x128xf32> to vector<8x128xbf16>
    %c0_12 = arith.constant 0 : index
    %c0_13 = arith.constant 0 : index
    %17 = vector.load %arg6[%c0_12, %c0_13] : memref<128x128xbf16, #tpu.memory_space<vmem>>, vector<128x128xbf16>
    %c0_14 = arith.constant 0 : index
    %c0_15 = arith.constant 0 : index
    %18 = vector.load %arg7[%c0_14, %c0_15] : memref<1x128xf32, #tpu.memory_space<vmem>>, vector<1x128xf32>
    %cst_16 = arith.constant dense<0.000000e+00> : vector<8x128xf32>
    %19 = tpu.matmul %16, %17, %cst_16 {dimension_numbers = #tpu.dot_dimension_numbers<[1], [0], [0], [1], [0, 0, 1, 1], [], []>} : vector<8x128xbf16>, vector<128x128xbf16>, vector<8x128xf32> -> vector<8x128xf32>
    %20 = vector.broadcast %18 : vector<1x128xf32> to vector<8x128xf32>
    %21 = arith.addf %19, %20 : vector<8x128xf32>
    %cst_17 = arith.constant 0.000000e+00 : f32
    %22 = vector.broadcast %cst_17 : f32 to vector<8x128xf32>
    %23 = arith.maximumf %21, %22 : vector<8x128xf32>
    %c0_18 = arith.constant 0 : index
    %c0_19 = arith.constant 0 : index
    %24 = vector.load %arg8[%c0_18, %c0_19] : memref<8x128xf32, #tpu.memory_space<vmem>>, vector<8x128xf32>
    tpu.vector_store %arg8[%c0_18, %c0_19], %23 {strides = array<i32>} : memref<8x128xf32, #tpu.memory_space<vmem>>, vector<8x128xf32>,
    return
  }
  func.func @transform_0(%arg0: i32) -> (i32, i32) {
    %c0_i32 = arith.constant 0 : i32
    %c0_i32_0 = arith.constant 0 : i32
    return %arg0, %c0_i32 : i32, i32
  }
  func.func @transform_1(%arg0: i32) -> (i32, i32) {
    %c0_i32 = arith.constant 0 : i32
    %c0_i32_0 = arith.constant 0 : i32
    %c0_i32_1 = arith.constant 0 : i32
    return %c0_i32, %c0_i32_0 : i32, i32
  }
  func.func @transform_2(%arg0: i32) -> (i32, i32) {
    %c0_i32 = arith.constant 0 : i32
    %c0_i32_0 = arith.constant 0 : i32
    %c0_i32_1 = arith.constant 0 : i32
    return %c0_i32, %c0_i32_0 : i32, i32
  }
  func.func @transform_3(%arg0: i32) -> (i32, i32) {
    %c0_i32 = arith.constant 0 : i32
    %c0_i32_0 = arith.constant 0 : i32
    %c0_i32_1 = arith.constant 0 : i32
    return %c0_i32, %c0_i32_0 : i32, i32
  }
  func.func @transform_4(%arg0: i32) -> (i32, i32) {
    %c0_i32 = arith.constant 0 : i32
    %c0_i32_0 = arith.constant 0 : i32
    %c0_i32_1 = arith.constant 0 : i32
    return %c0_i32, %c0_i32_0 : i32, i32
  }
  func.func @transform_5(%arg0: i32) -> (i32, i32) {
    %c0_i32 = arith.constant 0 : i32
    %c0_i32_0 = arith.constant 0 : i32
    %c0_i32_1 = arith.constant 0 : i32
    return %c0_i32, %c0_i32_0 : i32, i32
  }
  func.func @transform_6(%arg0: i32) -> (i32, i32) {
    %c0_i32 = arith.constant 0 : i32
    %c0_i32_0 = arith.constant 0 : i32
    %c0_i32_1 = arith.constant 0 : i32
    return %c0_i32, %c0_i32_0 : i32, i32
  }
  func.func @transform_7(%arg0: i32) -> (i32, i32) {
    %c0_i32 = arith.constant 0 : i32
    %c0_i32_0 = arith.constant 0 : i32
    return %arg0, %c0_i32 : i32, i32
  }
}

</mosaic_0001>

<llo_original>
// kernel: forward.1
$region0: #{forward.1}
  #allocation0 [shape = 'u32[]', space=smem, size = 0x4, offset = 0x4, fixed_abs, tag = 'smem constant byte address 0x4 - core index']
  #allocation1 [shape = 'u32[144,128]{1,0:T(1,128)}', space=vmem, size = 0x12000, scoped, tag = 'internal scratch']
  %s0 = inlined_call_operand.vmem [shape: bf16[8,128], index: 0, kind: input, shape index: {}]
  %s1 = inlined_call_operand.hbm [shape: bf16[128,128], index: 1, kind: input, shape index: {}]
  %s2 = inlined_call_operand.vmem [shape: f32[1,128], index: 2, kind: input, shape index: {}]
  %s3 = inlined_call_operand.hbm [shape: bf16[128,128], index: 3, kind: input, shape index: {}]
  %s4 = inlined_call_operand.vmem [shape: f32[1,128], index: 4, kind: input, shape index: {}]
  %s5 = inlined_call_operand.hbm [shape: bf16[128,128], index: 5, kind: input, shape index: {}]
  %s6 = inlined_call_operand.vmem [shape: f32[1,128], index: 6, kind: input, shape index: {}]
  %s7 = inlined_call_operand.hbm [shape: f32[8,128], index: 7, kind: output, shape index: {}]
  %s8 = sld [smem:[#allocation0]]
  $region50: #{forward.1} parent=0
    _
  %s10 = ssub.s32 1, %s8
  %s11 = scalar_select 0, %s10, %s8
  $region1: #{forward.1} parent=0
    #allocation2 [shape = 'u8[32768]{0}', space=vmem, size = 0x8000, scoped, tag = 'input window, operand 1, single buffered']
    #allocation3 [shape = 's32[1]{0}', space=sflag, size = 0x4, scoped, tag = 'scoped memory for forward.1']
    #allocation4 [shape = 's32[1]{0}', space=sflag, size = 0x4, scoped, tag = 'scoped memory for forward.1']
    #allocation5 [shape = 'u8[32768]{0}', space=vmem, size = 0x8000, scoped, tag = 'input window, operand 3, single buffered']
    #allocation6 [shape = 's32[1]{0}', space=sflag, size = 0x4, scoped, tag = 'scoped memory for forward.1']
    #allocation7 [shape = 'u8[32768]{0}', space=vmem, size = 0x8000, scoped, tag = 'input window, operand 5, single buffered']
    #allocation8 [shape = 'u8[4096]{0}', space=vmem, size = 0x1000, scoped, tag = 'output window, operand 0, single buffered']
    %12 = vsyncpa [#allocation3], 0
    %13 = vsyncpa [#allocation6], 0
    %14 = vsyncpa [#allocation4], 0
    // Predicated region
    $region2: #{forward.1} parent=1 // pred_check
      _
    $region3: #{forward.1} parent=1 // pred_check_branch
      %16 = sbr.rel (0) target = $region5
    $region4: #{forward.1} parent=1 // pred_region
      _
    $region5: #{forward.1} parent=1 // pred_fallthru
      _
    // Predicated region
    $region6: #{forward.1} parent=1 // pred_check
      _
    $region7: #{forward.1} parent=1 // pred_check_branch
      %18 = sbr.rel (0) target = $region9
    $region8: #{forward.1} parent=1 // pred_region
      %s20 = ssub.s32 1024, 1024
      %21 = vsyncadd [#allocation3], %s20
      %s22 = sshll.u32 [#allocation2], 4
      %s23 = int_to_ptr.vmem [resolvable:$true] %s22
      %28 = dma.hbm_to_vmem [thread:$0]  %s1, 1024, %s23, [#allocation3], 64, 64, 4
    $region9: #{forward.1} parent=1 // pred_fallthru
      _
    // Predicated region
    $region10: #{forward.1} parent=1 // pred_check
      _
    $region11: #{forward.1} parent=1 // pred_check_branch
      %30 = sbr.rel (0) target = $region13
    $region12: #{forward.1} parent=1 // pred_region
      _
    $region13: #{forward.1} parent=1 // pred_fallthru
      _
    // Predicated region
    $region14: #{forward.1} parent=1 // pred_check
      _
    $region15: #{forward.1} parent=1 // pred_check_branch
      %32 = sbr.rel (0) target = $region17
    $region16: #{forward.1} parent=1 // pred_region
      %s34 = ssub.s32 1024, 1024
      %35 = vsyncadd [#allocation6], %s34
      %s36 = sshll.u32 [#allocation5], 4
      %s37 = int_to_ptr.vmem [resolvable:$true] %s36
      %42 = dma.hbm_to_vmem [thread:$0]  %s3, 1024, %s37, [#allocation6], 64, 64, 4
    $region17: #{forward.1} parent=1 // pred_fallthru
      _
    // Predicated region
    $region18: #{forward.1} parent=1 // pred_check
      _
    $region19: #{forward.1} parent=1 // pred_check_branch
      %44 = sbr.rel (0) target = $region21
    $region20: #{forward.1} parent=1 // pred_region
      _
    $region21: #{forward.1} parent=1 // pred_fallthru
      _
    // Predicated region
    $region22: #{forward.1} parent=1 // pred_check
      _
    $region23: #{forward.1} parent=1 // pred_check_branch
      %46 = sbr.rel (0) target = $region25
    $region24: #{forward.1} parent=1 // pred_region
      %s48 = ssub.s32 1024, 1024
      %49 = vsyncadd [#allocation6], %s48
      %s50 = sshll.u32 [#allocation7], 4
      %s51 = int_to_ptr.vmem [resolvable:$true] %s50
      %56 = dma.hbm_to_vmem [thread:$0]  %s5, 1024, %s51, [#allocation6], 64, 64, 4
    $region25: #{forward.1} parent=1 // pred_fallthru
      _
    // Predicated region
    $region26: #{forward.1} parent=1 // pred_check
      _
    $region27: #{forward.1} parent=1 // pred_check_branch
      %58 = sbr.rel (0) target = $region29
    $region28: #{forward.1} parent=1 // pred_region
      _
    $region29: #{forward.1} parent=1 // pred_fallthru
      _
    // Predicated region
    $region30: #{forward.1} parent=1 // pred_check
      _
    $region31: #{forward.1} parent=1 // pred_check_branch
      %60 = sbr.rel (0) target = $region33
    $region32: #{forward.1} parent=1 // pred_region
      %61 = dma.done [#allocation3], 1024
    $region33: #{forward.1} parent=1 // pred_fallthru
      _
    // Predicated region
    $region34: #{forward.1} parent=1 // pred_check
      _
    $region35: #{forward.1} parent=1 // pred_check_branch
      %63 = sbr.rel (0) target = $region37
    $region36: #{forward.1} parent=1 // pred_region
      %64 = dma.done [#allocation6], 1024
    $region37: #{forward.1} parent=1 // pred_fallthru
      _
    // Predicated region
    $region38: #{forward.1} parent=1 // pred_check
      _
    $region39: #{forward.1} parent=1 // pred_check_branch
      %66 = sbr.rel (0) target = $region41
    $region40: #{forward.1} parent=1 // pred_region
      %67 = dma.done [#allocation6], 1024
    $region41: #{forward.1} parent=1 // pred_fallthru
      _
    %v69 = vld [vmem:[%s0] sm:$0xf]
    %v70 = vld [vmem:[#allocation2] sm:$0xf]
    %v71 = vld [vmem:[#allocation2 + $0x4] sm:$0xf]
    %v72 = vld [vmem:[#allocation2 + $0x8] sm:$0xf]
    %v73 = vld [vmem:[#allocation2 + $0xc] sm:$0xf]
    %v74 = vld [vmem:[#allocation2 + $0x10] sm:$0xf]
    %v75 = vld [vmem:[#allocation2 + $0x14] sm:$0xf]
    %v76 = vld [vmem:[#allocation2 + $0x18] sm:$0xf]
    %v77 = vld [vmem:[#allocation2 + $0x1c] sm:$0xf]
    %v78 = vld [vmem:[#allocation2 + $0x20] sm:$0xf]
    %v79 = vld [vmem:[#allocation2 + $0x24] sm:$0xf]
    %v80 = vld [vmem:[#allocation2 + $0x28] sm:$0xf]
    %v81 = vld [vmem:[#allocation2 + $0x2c] sm:$0xf]
    %v82 = vld [vmem:[#allocation2 + $0x30] sm:$0xf]
    %v83 = vld [vmem:[#allocation2 + $0x34] sm:$0xf]
    %v84 = vld [vmem:[#allocation2 + $0x38] sm:$0xf]
    %v85 = vld [vmem:[#allocation2 + $0x3c] sm:$0xf]
    %v86 = vld [vmem:[%s2] sm:$0x1]
    %v88 = vlaneseq
    %v89 = vshrl.u32 %v88, 7
    %v90 = vsub.s32 0, %v89
    %v91 = vrot.slane %v86, %v90
    %v109 = vunpack.c.l.b16 %v70
    %v110 = vunpack.c.l.b16 %v71
    %v111 = vunpack.c.l.b16 %v72
    %v112 = vunpack.c.l.b16 %v73
    %v113 = vunpack.c.l.b16 %v74
    %v114 = vunpack.c.l.b16 %v75
    %v115 = vunpack.c.l.b16 %v76
    %v116 = vunpack.c.l.b16 %v77
    %v117 = vunpack.c.l.b16 %v78
    %v118 = vunpack.c.l.b16 %v79
    %v119 = vunpack.c.l.b16 %v80
    %v120 = vunpack.c.l.b16 %v81
    %v121 = vunpack.c.l.b16 %v82
    %v122 = vunpack.c.l.b16 %v83
    %v123 = vunpack.c.l.b16 %v84
    %v124 = vunpack.c.l.b16 %v85
    %v125 = vpack.c.b16 %v110, %v109
    %v126 = vpack.c.b16 %v112, %v111
    %v127 = vpack.c.b16 %v114, %v113
    %v128 = vpack.c.b16 %v116, %v115
    %v129 = vpack.c.b16 %v118, %v117
    %v130 = vpack.c.b16 %v120, %v119
    %v131 = vpack.c.b16 %v122, %v121
    %v132 = vpack.c.b16 %v124, %v123
    %141 = vmatprep.subr.bf16.mxu0 0
    %142 = vmatpush1.bf16.msra.mxu0 %v125
    %143 = vmatprep.subr.bf16.mxu0 0
    %144 = vmatpush1.bf16.msra.mxu0 %v126
    %145 = vmatprep.subr.bf16.mxu0 0
    %146 = vmatpush1.bf16.msra.mxu0 %v127
    %147 = vmatprep.subr.bf16.mxu0 0
    %148 = vmatpush1.bf16.msra.mxu0 %v128
    %149 = vmatprep.subr.bf16.mxu0 0
    %150 = vmatpush1.bf16.msra.mxu0 %v129
    %151 = vmatprep.subr.bf16.mxu0 0
    %152 = vmatpush1.bf16.msra.mxu0 %v130
    %153 = vmatprep.subr.bf16.mxu0 0
    %154 = vmatpush1.bf16.msra.mxu0 %v131
    %155 = vmatprep.subr.bf16.mxu0 0
    %156 = vmatpush1.bf16.msra.mxu0 %v132
    %157 = vmatprep.subr.bf16.mxu0 0
    %158 = vmatpush1.bf16.msra.mxu0 0
    %159 = vmatprep.subr.bf16.mxu0 0
    %160 = vmatpush1.bf16.msra.mxu0 0
    %161 = vmatprep.subr.bf16.mxu0 0
    %162 = vmatpush1.bf16.msra.mxu0 0
    %163 = vmatprep.subr.bf16.mxu0 0
    %164 = vmatpush1.bf16.msra.mxu0 0
    %165 = vmatprep.subr.bf16.mxu0 0
    %166 = vmatpush1.bf16.msra.mxu0 0
    %167 = vmatprep.subr.bf16.mxu0 0
    %168 = vmatpush1.bf16.msra.mxu0 0
    %169 = vmatprep.subr.bf16.mxu0 0
    %170 = vmatpush1.bf16.msra.mxu0 0
    %171 = vmatprep.subr.bf16.mxu0 0
    %172 = vmatpush1.bf16.msra.mxu0 0
    %173 = vmatprep.mubr.bf16.mxu0 0
    %174 = vmatmul.mubr.bf16.gmra.mrb[0].mxu0 %v69
    %v175 = vpop.f32.mrb[0].mxu0
    %v176 = vadd.f32 %v91, %v175
    %v177 = vpop.f32.mrb[0].mxu0
    %v178 = vpop.f32.mrb[0].mxu0
    %v179 = vpop.f32.mrb[0].mxu0
    %180 = vdwg.mxu0
    %v181 = vmax.f32 %v176, 0.0
    %v182 = vpack.c.bf16 %v181, %v181
    %v183 = vld [vmem:[#allocation5] sm:$0xf]
    %v184 = vld [vmem:[#allocation5 + $0x4] sm:$0xf]
    %v185 = vld [vmem:[#allocation5 + $0x8] sm:$0xf]
    %v186 = vld [vmem:[#allocation5 + $0xc] sm:$0xf]
    %v187 = vld [vmem:[#allocation5 + $0x10] sm:$0xf]
    %v188 = vld [vmem:[#allocation5 + $0x14] sm:$0xf]
    %v189 = vld [vmem:[#allocation5 + $0x18] sm:$0xf]
    %v190 = vld [vmem:[#allocation5 + $0x1c] sm:$0xf]
    %v191 = vld [vmem:[#allocation5 + $0x20] sm:$0xf]
    %v192 = vld [vmem:[#allocation5 + $0x24] sm:$0xf]
    %v193 = vld [vmem:[#allocation5 + $0x28] sm:$0xf]
    %v194 = vld [vmem:[#allocation5 + $0x2c] sm:$0xf]
    %v195 = vld [vmem:[#allocation5 + $0x30] sm:$0xf]
    %v196 = vld [vmem:[#allocation5 + $0x34] sm:$0xf]
    %v197 = vld [vmem:[#allocation5 + $0x38] sm:$0xf]
    %v198 = vld [vmem:[#allocation5 + $0x3c] sm:$0xf]
    %v199 = vld [vmem:[%s4] sm:$0x1]
    %v201 = vlaneseq
    %v202 = vshrl.u32 %v201, 7
    %v203 = vsub.s32 0, %v202
    %v204 = vrot.slane %v199, %v203
    %v222 = vunpack.c.l.b16 %v183
    %v223 = vunpack.c.l.b16 %v184
    %v224 = vunpack.c.l.b16 %v185
    %v225 = vunpack.c.l.b16 %v186
    %v226 = vunpack.c.l.b16 %v187
    %v227 = vunpack.c.l.b16 %v188
    %v228 = vunpack.c.l.b16 %v189
    %v229 = vunpack.c.l.b16 %v190
    %v230 = vunpack.c.l.b16 %v191
    %v231 = vunpack.c.l.b16 %v192
    %v232 = vunpack.c.l.b16 %v193
    %v233 = vunpack.c.l.b16 %v194
    %v234 = vunpack.c.l.b16 %v195
    %v235 = vunpack.c.l.b16 %v196
    %v236 = vunpack.c.l.b16 %v197
    %v237 = vunpack.c.l.b16 %v198
    %v238 = vpack.c.b16 %v223, %v222
    %v239 = vpack.c.b16 %v225, %v224
    %v240 = vpack.c.b16 %v227, %v226
    %v241 = vpack.c.b16 %v229, %v228
    %v242 = vpack.c.b16 %v231, %v230
    %v243 = vpack.c.b16 %v233, %v232
    %v244 = vpack.c.b16 %v235, %v234
    %v245 = vpack.c.b16 %v237, %v236
    %254 = vmatprep.subr.bf16.mxu0 0
    %255 = vmatpush1.bf16.msra.mxu0 %v238
    %256 = vmatprep.subr.bf16.mxu0 0
    %257 = vmatpush1.bf16.msra.mxu0 %v239
    %258 = vmatprep.subr.bf16.mxu0 0
    %259 = vmatpush1.bf16.msra.mxu0 %v240
    %260 = vmatprep.subr.bf16.mxu0 0
    %261 = vmatpush1.bf16.msra.mxu0 %v241
    %262 = vmatprep.subr.bf16.mxu0 0
    %263 = vmatpush1.bf16.msra.mxu0 %v242
    %264 = vmatprep.subr.bf16.mxu0 0
    %265 = vmatpush1.bf16.msra.mxu0 %v243
    %266 = vmatprep.subr.bf16.mxu0 0
    %267 = vmatpush1.bf16.msra.mxu0 %v244
    %268 = vmatprep.subr.bf16.mxu0 0
    %269 = vmatpush1.bf16.msra.mxu0 %v245
    %270 = vmatprep.subr.bf16.mxu0 0
    %271 = vmatpush1.bf16.msra.mxu0 0
    %272 = vmatprep.subr.bf16.mxu0 0
    %273 = vmatpush1.bf16.msra.mxu0 0
    %274 = vmatprep.subr.bf16.mxu0 0
    %275 = vmatpush1.bf16.msra.mxu0 0
    %276 = vmatprep.subr.bf16.mxu0 0
    %277 = vmatpush1.bf16.msra.mxu0 0
    %278 = vmatprep.subr.bf16.mxu0 0
    %279 = vmatpush1.bf16.msra.mxu0 0
    %280 = vmatprep.subr.bf16.mxu0 0
    %281 = vmatpush1.bf16.msra.mxu0 0
    %282 = vmatprep.subr.bf16.mxu0 0
    %283 = vmatpush1.bf16.msra.mxu0 0
    %284 = vmatprep.subr.bf16.mxu0 0
    %285 = vmatpush1.bf16.msra.mxu0 0
    %286 = vmatprep.mubr.bf16.mxu0 0
    %287 = vmatmul.mubr.bf16.gmra.mrb[0].mxu0 %v182
    %v288 = vpop.f32.mrb[0].mxu0
    %v289 = vadd.f32 %v204, %v288
    %v290 = vpop.f32.mrb[0].mxu0
    %v291 = vpop.f32.mrb[0].mxu0
    %v292 = vpop.f32.mrb[0].mxu0
    %293 = vdwg.mxu0
    %v294 = vmax.f32 %v289, 0.0
    %v295 = vpack.c.bf16 %v294, %v294
    %v296 = vld [vmem:[#allocation7] sm:$0xf]
    %v297 = vld [vmem:[#allocation7 + $0x4] sm:$0xf]
    %v298 = vld [vmem:[#allocation7 + $0x8] sm:$0xf]
    %v299 = vld [vmem:[#allocation7 + $0xc] sm:$0xf]
    %v300 = vld [vmem:[#allocation7 + $0x10] sm:$0xf]
    %v301 = vld [vmem:[#allocation7 + $0x14] sm:$0xf]
    %v302 = vld [vmem:[#allocation7 + $0x18] sm:$0xf]
    %v303 = vld [vmem:[#allocation7 + $0x1c] sm:$0xf]
    %v304 = vld [vmem:[#allocation7 + $0x20] sm:$0xf]
    %v305 = vld [vmem:[#allocation7 + $0x24] sm:$0xf]
    %v306 = vld [vmem:[#allocation7 + $0x28] sm:$0xf]
    %v307 = vld [vmem:[#allocation7 + $0x2c] sm:$0xf]
    %v308 = vld [vmem:[#allocation7 + $0x30] sm:$0xf]
    %v309 = vld [vmem:[#allocation7 + $0x34] sm:$0xf]
    %v310 = vld [vmem:[#allocation7 + $0x38] sm:$0xf]
    %v311 = vld [vmem:[#allocation7 + $0x3c] sm:$0xf]
    %v312 = vld [vmem:[%s6] sm:$0x1]
    %v314 = vlaneseq
    %v315 = vshrl.u32 %v314, 7
    %v316 = vsub.s32 0, %v315
    %v317 = vrot.slane %v312, %v316
    %v335 = vunpack.c.l.b16 %v296
    %v336 = vunpack.c.l.b16 %v297
    %v337 = vunpack.c.l.b16 %v298
    %v338 = vunpack.c.l.b16 %v299
    %v339 = vunpack.c.l.b16 %v300
    %v340 = vunpack.c.l.b16 %v301
    %v341 = vunpack.c.l.b16 %v302
    %v342 = vunpack.c.l.b16 %v303
    %v343 = vunpack.c.l.b16 %v304
    %v344 = vunpack.c.l.b16 %v305
    %v345 = vunpack.c.l.b16 %v306
    %v346 = vunpack.c.l.b16 %v307
    %v347 = vunpack.c.l.b16 %v308
    %v348 = vunpack.c.l.b16 %v309
    %v349 = vunpack.c.l.b16 %v310
    %v350 = vunpack.c.l.b16 %v311
    %v351 = vpack.c.b16 %v336, %v335
    %v352 = vpack.c.b16 %v338, %v337
    %v353 = vpack.c.b16 %v340, %v339
    %v354 = vpack.c.b16 %v342, %v341
    %v355 = vpack.c.b16 %v344, %v343
    %v356 = vpack.c.b16 %v346, %v345
    %v357 = vpack.c.b16 %v348, %v347
    %v358 = vpack.c.b16 %v350, %v349
    %367 = vmatprep.subr.bf16.mxu0 0
    %368 = vmatpush1.bf16.msra.mxu0 %v351
    %369 = vmatprep.subr.bf16.mxu0 0
    %370 = vmatpush1.bf16.msra.mxu0 %v352
    %371 = vmatprep.subr.bf16.mxu0 0
    %372 = vmatpush1.bf16.msra.mxu0 %v353
    %373 = vmatprep.subr.bf16.mxu0 0
    %374 = vmatpush1.bf16.msra.mxu0 %v354
    %375 = vmatprep.subr.bf16.mxu0 0
    %376 = vmatpush1.bf16.msra.mxu0 %v355
    %377 = vmatprep.subr.bf16.mxu0 0
    %378 = vmatpush1.bf16.msra.mxu0 %v356
    %379 = vmatprep.subr.bf16.mxu0 0
    %380 = vmatpush1.bf16.msra.mxu0 %v357
    %381 = vmatprep.subr.bf16.mxu0 0
    %382 = vmatpush1.bf16.msra.mxu0 %v358
    %383 = vmatprep.subr.bf16.mxu0 0
    %384 = vmatpush1.bf16.msra.mxu0 0
    %385 = vmatprep.subr.bf16.mxu0 0
    %386 = vmatpush1.bf16.msra.mxu0 0
    %387 = vmatprep.subr.bf16.mxu0 0
    %388 = vmatpush1.bf16.msra.mxu0 0
    %389 = vmatprep.subr.bf16.mxu0 0
    %390 = vmatpush1.bf16.msra.mxu0 0
    %391 = vmatprep.subr.bf16.mxu0 0
    %392 = vmatpush1.bf16.msra.mxu0 0
    %393 = vmatprep.subr.bf16.mxu0 0
    %394 = vmatpush1.bf16.msra.mxu0 0
    %395 = vmatprep.subr.bf16.mxu0 0
    %396 = vmatpush1.bf16.msra.mxu0 0
    %397 = vmatprep.subr.bf16.mxu0 0
    %398 = vmatpush1.bf16.msra.mxu0 0
    %399 = vmatprep.mubr.bf16.mxu0 0
    %400 = vmatmul.mubr.bf16.gmra.mrb[0].mxu0 %v295
    %v401 = vpop.f32.mrb[0].mxu0
    %v402 = vadd.f32 %v317, %v401
    %v403 = vpop.f32.mrb[0].mxu0
    %v404 = vpop.f32.mrb[0].mxu0
    %v405 = vpop.f32.mrb[0].mxu0
    %406 = vdwg.mxu0
    %v407 = vmax.f32 %v402, 0.0
    %408 = vst [vmem:[#allocation8] sm:$0xff] %v407
    // Predicated region
    $region42: #{forward.1} parent=1 // pred_check
      _
    $region43: #{forward.1} parent=1 // pred_check_branch
      %410 = sbr.rel (0) target = $region45
    $region44: #{forward.1} parent=1 // pred_region
      %s412 = ssub.s32 128, 128
      %413 = vsyncadd [#allocation4], %s412
      %s415 = sshll.u32 [#allocation8], 4
      %s416 = int_to_ptr.vmem [resolvable:$true] %s415
      %418 = dma.vmem_to_hbm [thread:$0]  %s416, 128, %s7, [#allocation4]
    $region45: #{forward.1} parent=1 // pred_fallthru
      _
    // Predicated region
    $region46: #{forward.1} parent=1 // pred_check
      _
    $region47: #{forward.1} parent=1 // pred_check_branch
      %420 = sbr.rel (0) target = $region49
    $region48: #{forward.1} parent=1 // pred_region
      %421 = dma.done [#allocation4], 128
    $region49: #{forward.1} parent=1 // pred_fallthru
      _
    %422 = vsyncpa [#allocation3], 1
    %423 = vsyncpa [#allocation6], 1
    %424 = vsyncpa [#allocation4], 1

</llo_original>
